<compile_context>
chip_gen: v7x
topology: tpu7x:2x2x1
jax: 0.10.0
libtpu: 0.0.40
codegen_flags: <defaults>
</compile_context>

<pallas_src>
import jax
import jax.numpy as jnp
from jax.experimental import pallas as pl
from jax.experimental.pallas import tpu as pltpu

LANE = 128     # lane (last-dim) alignment
SUBLANE = 8    # sublane (second-to-last dim) alignment


def _round_up(n, m):
    return ((n + m - 1) // m) * m


def _pad_axis(a, axis, target):
    pad = target - a.shape[axis]
    if pad <= 0:
        return a
    widths = [(0, 0)] * a.ndim
    widths[axis] = (0, pad)
    return jnp.pad(a, widths)


# ---------------------------------------------------------------------------
# Kernel
# ---------------------------------------------------------------------------
def critic_kernel(x_ref, u_ref, w_in_ref, b_in_ref, w_h_ref, b_h_ref,
                  w_out_ref, b_out_ref, o_ref, cat_ref):
    sdim = x_ref.shape[1]
    adim = u_ref.shape[1]
    cdt = w_in_ref.dtype                     # compute dtype (f32 default)

    # Input layer: pack [x | u | 0-pad] into a lane-dense (bm, Kp) VMEM
    # scratch so the fused concat becomes a single K=Kp MXU push instead of
    # two short-K pushes.  Zero the scratch EVERY step (not only at
    # program_id==0): on v7x the parallel grid shards across TensorCores and
    # each core has its own scratch, so a step-0 guard would leave one core's
    # pad lanes uninitialized.
    cat_ref[...] = jnp.zeros_like(cat_ref)
    cat_ref[:, :sdim] = x_ref[...].astype(cdt)
    cat_ref[:, sdim:sdim + adim] = u_ref[...].astype(cdt)

    h = (jnp.dot(cat_ref[...], w_in_ref[...],
                 preferred_element_type=jnp.float32) + b_in_ref[...])
    h = jnp.maximum(h, 0.0)

    # Hidden layers: static trip count -> fully unrolled so the scheduler can
    # interleave consecutive MXU pushes with bias/ReLU VPU work.
    # TODO(synk): for very large L*Hp^2 (>~40 MiB; v7x has 64 MiB VMEM/TC),
    # move the layer index onto an 'arbitrary' grid axis with a (1, Hp, Hp)
    # W_hidden block and carry h in a VMEM scratch instead of unrolling.
    for l in range(w_h_ref.shape[0]):
        h = jnp.maximum(
            jnp.dot(h.astype(cdt), w_h_ref[l],
                    preferred_element_type=jnp.float32) + b_h_ref[l],
            0.0)

    # Output layer (no activation).
    o_ref[...] = (jnp.dot(h.astype(cdt), w_out_ref[...],
                          preferred_element_type=jnp.float32)
                  + b_out_ref[...]).astype(o_ref.dtype)


# ---------------------------------------------------------------------------
# Parameter handling
# ---------------------------------------------------------------------------
def init_critic_params(key, state_dim, action_dim, hidden_size,
                       num_hidden_layer=1):
    """PyTorch-nn.Linear-style init (uniform +/- 1/sqrt(fan_in)).
    Weights are (in_features, out_features) so y = x @ W + b."""
    in_dim = state_dim + action_dim
    out_dim = action_dim
    keys = jax.random.split(key, 4 + 2 * num_hidden_layer)

    def linear(kw, kb, fan_in, fan_out):
        bound = 1.0 / jnp.sqrt(jnp.float32(fan_in))
        w = jax.random.uniform(kw, (fan_in, fan_out), jnp.float32, -bound, bound)
        b = jax.random.uniform(kb, (1, fan_out), jnp.float32, -bound, bound)
        return w, b

    w_in, b_in = linear(keys[0], keys[1], in_dim, hidden_size)
    w_hs, b_hs = [], []
    for l in range(num_hidden_layer):
        w, b = linear(keys[2 + 2 * l], keys[3 + 2 * l], hidden_size, hidden_size)
        w_hs.append(w)
        b_hs.append(b)
    if w_hs:
        w_h = jnp.stack(w_hs, axis=0)                    # (L, H, H)
        b_h = jnp.stack(b_hs, axis=0)                    # (L, 1, H)
    else:
        w_h = jnp.zeros((0, hidden_size, hidden_size), jnp.float32)
        b_h = jnp.zeros((0, 1, hidden_size), jnp.float32)
    w_out, b_out = linear(keys[-2], keys[-1], hidden_size, out_dim)
    return (w_in, b_in, w_h, b_h, w_out, b_out)


def prepare_padded_params(params, *, compute_dtype=jnp.float32,
                          lane_multiple=LANE, pad_output_lanes=True):
    """One-time packing/padding of the Critic parameters.

    * W_in is kept as a single (Kp, Hp) matrix: rows [0:in_dim] multiply the
      in-kernel packed [x | u] activation, rows [in_dim:Kp] multiply the zero
      pad (exact).
    * Hidden/output lane dims are zero-padded to `lane_multiple` (128; use 256
      on v6e/v7x when hidden matmuls dominate).  Padded lanes stay exactly 0
      through ReLU and the final affine.
    * pad_output_lanes=False emits a (B, out_dim) output (masked store, no
      HBM write amplification) -- preferred for large B with tiny out_dim.
    * compute_dtype=jnp.bfloat16 is an opt-in fast path (f32 accumulation);
      it will not meet 1e-5 at large H, so default stays f32.
    """
    w_in, b_in, w_h, b_h, w_out, b_out = params
    in_dim, H = w_in.shape
    out_dim = w_out.shape[1]
    Kp = _round_up(in_dim, lane_multiple)
    Hp = _round_up(H, lane_multiple)
    Op = _round_up(out_dim, lane_multiple) if pad_output_lanes else out_dim

    w_in_p = _pad_axis(_pad_axis(w_in, 0, Kp), 1, Hp)    # (Kp, Hp)
    b_in_p = _pad_axis(b_in, 1, Hp)                      # (1, Hp)

    if w_h.shape[0] == 0:
        # num_hidden_layer == 0: identity layer + ReLU is exact (h >= 0 after
        # the input ReLU); keeps the kernel signature uniform.
        w_h_p = jnp.eye(Hp, dtype=jnp.float32)[None]     # (1, Hp, Hp)
        b_h_p = jnp.zeros((1, 1, Hp), jnp.float32)
    else:
        w_h_p = _pad_axis(_pad_axis(w_h, 1, Hp), 2, Hp)  # (L, Hp, Hp)
        b_h_p = _pad_axis(b_h, 2, Hp)                    # (L, 1, Hp)

    w_out_p = _pad_axis(_pad_axis(w_out, 0, Hp), 1, Op)  # (Hp, Op)
    b_out_p = _pad_axis(b_out, 1, Op)                    # (1, Op)

    cdt = compute_dtype
    w_in_p = w_in_p.astype(cdt)
    w_h_p = w_h_p.astype(cdt)
    w_out_p = w_out_p.astype(cdt)
    # Biases stay f32 (added after the f32-accumulated matmul).
    return (w_in_p, b_in_p, w_h_p, b_h_p, w_out_p, b_out_p), out_dim


def _vmem_limit_bytes(bm, sdim, adim, Kp, Hp, Op, L, w_itemsize):
    """Explicit VMEM budget: weights single-buffered (Buffered(1)) + double-
    buffered x/u/out tiles + packed-input scratch + live-activation headroom,
    with 25% + 2 MiB margin, floored at 16 MiB and capped at 128 MiB."""
    weight_bytes = (Kp * Hp + L * Hp * Hp + Hp * Op) * w_itemsize
    bias_bytes = (Hp + L * Hp + Op) * 4
    io_bytes = 2 * bm * (sdim + adim + Op) * 4
    scratch_bytes = bm * Kp * w_itemsize
    act_bytes = 4 * bm * Hp * 4
    total = weight_bytes + bias_bytes + io_bytes + scratch_bytes + act_bytes
    return int(min(max(total * 5 // 4 + (2 << 20), 16 << 20), 128 << 20))


# ---------------------------------------------------------------------------
# Wrapper
# ---------------------------------------------------------------------------
def critic_forward(x, u, padded_params, out_dim, *, max_bm=512):
    """x: (B, state_dim), u: (B, action_dim) -> (B, out_dim)."""
    w_in, b_in, w_h, b_h, w_out, b_out = padded_params
    B, sdim = x.shape
    adim = u.shape[1]
    Kp, Hp = w_in.shape
    L = w_h.shape[0]
    Op = w_out.shape[1]
    cdt = w_in.dtype

    # Batch tiling.  When the batch fits in 2*max_bm, split it into (up to)
    # two tiles so the 'parallel' grid axis shards across both TensorCores on
    # v7x (previously grid=(1,) left one core idle for B<=256).  Otherwise use
    # max_bm-row tiles; on single-TC v5e/v6e raise max_bm for large B -- the
    # weights are not re-DMA'd across steps, so per-step cost is only ~600
    # cycles plus the tiny x/u/out DMAs.
    B_sub = _round_up(max(B, 1), SUBLANE)
    if B_sub <= 2 * max_bm:
        bm = _round_up(pl.cdiv(B_sub, 2), SUBLANE)
    else:
        bm = max_bm
    B_pad = _round_up(B, bm)
    grid = (B_pad // bm,)

    x_p = _pad_axis(x, 0, B_pad)
    u_p = _pad_axis(u, 0, B_pad)

    # Weights/biases never change across grid steps -> single-buffer them.
    const = dict(pipeline_mode=pl.Buffered(1))

    out_p = pl.pallas_call(
        critic_kernel,
        out_shape=jax.ShapeDtypeStruct((B_pad, Op), jnp.float32),
        grid_spec=pltpu.PrefetchScalarGridSpec(
            num_scalar_prefetch=0,
            grid=grid,
            in_specs=[
                pl.BlockSpec((bm, sdim), lambda i: (i, 0)),               # x
                pl.BlockSpec((bm, adim), lambda i: (i, 0)),               # u
                pl.BlockSpec((Kp, Hp), lambda i: (0, 0), **const),        # W_in
                pl.BlockSpec((1, Hp), lambda i: (0, 0), **const),         # b_in
                pl.BlockSpec((L, Hp, Hp), lambda i: (0, 0, 0), **const),  # W_h
                pl.BlockSpec((L, 1, Hp), lambda i: (0, 0, 0), **const),   # b_h
                pl.BlockSpec((Hp, Op), lambda i: (0, 0), **const),        # W_out
                pl.BlockSpec((1, Op), lambda i: (0, 0), **const),         # b_out
            ],
            out_specs=pl.BlockSpec((bm, Op), lambda i: (i, 0)),
            scratch_shapes=[pltpu.VMEM((bm, Kp), cdt)],   # packed [x|u|0] tile
        ),
        compiler_params=pltpu.CompilerParams(
            dimension_semantics=("parallel",),
            vmem_limit_bytes=_vmem_limit_bytes(
                bm, sdim, adim, Kp, Hp, Op, L, w_in.dtype.itemsize)),
    )(x_p, u_p, w_in, b_in, w_h, b_h, w_out, b_out)

    return out_p[:B, :out_dim]


# ---------------------------------------------------------------------------
# Pure-JAX reference (unpadded params)
# ---------------------------------------------------------------------------
def critic_ref(x, u, params):
    w_in, b_in, w_h, b_h, w_out, b_out = params
    h = jnp.concatenate([x, u], axis=1)
    h = jnp.maximum(h @ w_in + b_in, 0.0)
    for l in range(w_h.shape[0]):
        h = jnp.maximum(h @ w_h[l] + b_h[l], 0.0)
    return h @ w_out + b_out


if __name__ == "__main__":
    state_dim, action_dim, hidden_size, num_hidden_layer = 16, 8, 32, 1
    batch = 16

    key = jax.random.PRNGKey(0)
    k_params, k_x, k_u = jax.random.split(key, 3)
    params = init_critic_params(k_params, state_dim, action_dim, hidden_size,
                                num_hidden_layer)

    x = jax.random.normal(k_x, (batch, state_dim), jnp.float32)
    u = jax.random.normal(k_u, (batch, action_dim), jnp.float32)
    ref = critic_ref(x, u, params)

    # Path 1: lane-padded output (unmasked stores; best for small B).
    pp_pad, out_dim = prepare_padded_params(params, pad_output_lanes=True)
    out_pad = jax.block_until_ready(critic_forward(x, u, pp_pad, out_dim))
    assert out_pad.shape == (batch, out_dim)
    assert jnp.allclose(out_pad, ref, atol=1e-5, rtol=1e-5), float(
        jnp.max(jnp.abs(out_pad - ref)))

    # Path 2: unpadded output (no HBM write amplification; best for large B
    # with tiny out_dim).
    pp_raw, out_dim = prepare_padded_params(params, pad_output_lanes=False)
    out_raw = jax.block_until_ready(critic_forward(x, u, pp_raw, out_dim))
    assert out_raw.shape == (batch, out_dim)
    assert jnp.allclose(out_raw, ref, atol=1e-5, rtol=1e-5), float(
        jnp.max(jnp.abs(out_raw - ref)))

    print("KERNEL_OK")
</pallas_src>

<mosaic_0001>
module attributes {stable_mosaic.version = 11 : i64} {
  func.func @critic_kernel(%arg0: i32, %arg1: memref<8x16xf32, #tpu.memory_space<vmem>>, %arg2: memref<8x8xf32, #tpu.memory_space<vmem>>, %arg3: memref<128x128xf32, #tpu.memory_space<vmem>>, %arg4: memref<1x128xf32, #tpu.memory_space<vmem>>, %arg5: memref<1x128x128xf32, #tpu.memory_space<vmem>>, %arg6: memref<1x1x128xf32, #tpu.memory_space<vmem>>, %arg7: memref<128x128xf32, #tpu.memory_space<vmem>>, %arg8: memref<1x128xf32, #tpu.memory_space<vmem>>, %arg9: memref<8x128xf32, #tpu.memory_space<vmem>>, %arg10: memref<8x128xf32, #tpu.memory_space<vmem>>) attributes {dimension_semantics = [#tpu.dimension_semantics<parallel>], iteration_bounds = array<i64: 2>, scalar_prefetch = 0 : i64, scratch_operands = 1 : i64, tpu.core_type = #tpu.core_type<tc>, window_params = [{transform_indices = @transform_0, window_bounds = array<i64: 8, 16>}, {transform_indices = @transform_1, window_bounds = array<i64: 8, 8>}, {pipeline_mode = #tpu.pipeline_mode<synchronous>, transform_indices = @transform_2, window_bounds = array<i64: 128, 128>}, {pipeline_mode = #tpu.pipeline_mode<synchronous>, transform_indices = @transform_3, window_bounds = array<i64: 1, 128>}, {pipeline_mode = #tpu.pipeline_mode<synchronous>, transform_indices = @transform_4, window_bounds = array<i64: 1, 128, 128>}, {pipeline_mode = #tpu.pipeline_mode<synchronous>, transform_indices = @transform_5, window_bounds = array<i64: 1, 1, 128>}, {pipeline_mode = #tpu.pipeline_mode<synchronous>, transform_indices = @transform_6, window_bounds = array<i64: 128, 128>}, {pipeline_mode = #tpu.pipeline_mode<synchronous>, transform_indices = @transform_7, window_bounds = array<i64: 1, 128>}, {transform_indices = @transform_8, window_bounds = array<i64: 8, 128>}]} {
    %cst = arith.constant 0.000000e+00 : f32
    %0 = vector.broadcast %cst : f32 to vector<8x128xf32>
    %c0 = arith.constant 0 : index
    %c0_0 = arith.constant 0 : index
    %1 = vector.load %arg10[%c0, %c0_0] : memref<8x128xf32, #tpu.memory_space<vmem>>, vector<8x128xf32>
    tpu.vector_store %arg10[%c0, %c0_0], %0 {strides = array<i32>} : memref<8x128xf32, #tpu.memory_space<vmem>>, vector<8x128xf32>,
    %c0_1 = arith.constant 0 : index
    %c0_2 = arith.constant 0 : index
    %2 = vector.load %arg1[%c0_1, %c0_2] : memref<8x16xf32, #tpu.memory_space<vmem>>, vector<8x16xf32>
    %c0_3 = arith.constant 0 : index
    %c0_4 = arith.constant 0 : index
    %3 = vector.load %arg10[%c0_3, %c0_4] : memref<8x128xf32, #tpu.memory_space<vmem>>, vector<8x16xf32>
    tpu.vector_store %arg10[%c0_3, %c0_4], %2 {strides = array<i32>} : memref<8x128xf32, #tpu.memory_space<vmem>>, vector<8x16xf32>,
    %c0_5 = arith.constant 0 : index
    %c0_6 = arith.constant 0 : index
    %4 = vector.load %arg2[%c0_5, %c0_6] : memref<8x8xf32, #tpu.memory_space<vmem>>, vector<8x8xf32>
    %c0_7 = arith.constant 0 : index
    %c16 = arith.constant 16 : index
    %5 = vector.load %arg10[%c0_7, %c16] : memref<8x128xf32, #tpu.memory_space<vmem>>, vector<8x8xf32>
    tpu.vector_store %arg10[%c0_7, %c16], %4 {strides = array<i32>} : memref<8x128xf32, #tpu.memory_space<vmem>>, vector<8x8xf32>,
    %c0_8 = arith.constant 0 : index
    %c0_9 = arith.constant 0 : index
    %6 = vector.load %arg10[%c0_8, %c0_9] : memref<8x128xf32, #tpu.memory_space<vmem>>, vector<8x128xf32>
    %c0_10 = arith.constant 0 : index
    %c0_11 = arith.constant 0 : index
    %7 = vector.load %arg3[%c0_10, %c0_11] : memref<128x128xf32, #tpu.memory_space<vmem>>, vector<128x128xf32>
    %cst_12 = arith.constant dense<0.000000e+00> : vector<8x128xf32>
    %8 = tpu.matmul %6, %7, %cst_12 {dimension_numbers = #tpu.dot_dimension_numbers<[1], [0], [0], [1], [0, 0, 1, 1], [], []>} : vector<8x128xf32>, vector<128x128xf32>, vector<8x128xf32> -> vector<8x128xf32>
    %c0_13 = arith.constant 0 : index
    %c0_14 = arith.constant 0 : index
    %9 = vector.load %arg4[%c0_13, %c0_14] : memref<1x128xf32, #tpu.memory_space<vmem>>, vector<1x128xf32>
    %10 = vector.broadcast %9 : vector<1x128xf32> to vector<8x128xf32>
    %11 = arith.addf %8, %10 : vector<8x128xf32>
    %cst_15 = arith.constant 0.000000e+00 : f32
    %12 = vector.broadcast %cst_15 : f32 to vector<8x128xf32>
    %13 = arith.maximumf %11, %12 : vector<8x128xf32>
    %c0_16 = arith.constant 0 : index
    %c0_17 = arith.constant 0 : index
    %c0_18 = arith.constant 0 : index
    %14 = vector.load %arg5[%c0_16, %c0_17, %c0_18] : memref<1x128x128xf32, #tpu.memory_space<vmem>>, vector<1x128x128xf32>
    %15 = vector.shape_cast %14 : vector<1x128x128xf32> to vector<128x128xf32>
    %cst_19 = arith.constant dense<0.000000e+00> : vector<8x128xf32>
    %16 = tpu.matmul %13, %15, %cst_19 {dimension_numbers = #tpu.dot_dimension_numbers<[1], [0], [0], [1], [0, 0, 1, 1], [], []>} : vector<8x128xf32>, vector<128x128xf32>, vector<8x128xf32> -> vector<8x128xf32>
    %c0_20 = arith.constant 0 : index
    %c0_21 = arith.constant 0 : index
    %c0_22 = arith.constant 0 : index
    %17 = vector.load %arg6[%c0_20, %c0_21, %c0_22] : memref<1x1x128xf32, #tpu.memory_space<vmem>>, vector<1x1x128xf32>
    %18 = vector.shape_cast %17 : vector<1x1x128xf32> to vector<1x128xf32>
    %19 = vector.broadcast %18 : vector<1x128xf32> to vector<8x128xf32>
    %20 = arith.addf %16, %19 : vector<8x128xf32>
    %cst_23 = arith.constant 0.000000e+00 : f32
    %21 = vector.broadcast %cst_23 : f32 to vector<8x128xf32>
    %22 = arith.maximumf %20, %21 : vector<8x128xf32>
    %c0_24 = arith.constant 0 : index
    %c0_25 = arith.constant 0 : index
    %23 = vector.load %arg7[%c0_24, %c0_25] : memref<128x128xf32, #tpu.memory_space<vmem>>, vector<128x128xf32>
    %cst_26 = arith.constant dense<0.000000e+00> : vector<8x128xf32>
    %24 = tpu.matmul %22, %23, %cst_26 {dimension_numbers = #tpu.dot_dimension_numbers<[1], [0], [0], [1], [0, 0, 1, 1], [], []>} : vector<8x128xf32>, vector<128x128xf32>, vector<8x128xf32> -> vector<8x128xf32>
    %c0_27 = arith.constant 0 : index
    %c0_28 = arith.constant 0 : index
    %25 = vector.load %arg8[%c0_27, %c0_28] : memref<1x128xf32, #tpu.memory_space<vmem>>, vector<1x128xf32>
    %26 = vector.broadcast %25 : vector<1x128xf32> to vector<8x128xf32>
    %27 = arith.addf %24, %26 : vector<8x128xf32>
    %c0_29 = arith.constant 0 : index
    %c0_30 = arith.constant 0 : index
    %28 = vector.load %arg9[%c0_29, %c0_30] : memref<8x128xf32, #tpu.memory_space<vmem>>, vector<8x128xf32>
    tpu.vector_store %arg9[%c0_29, %c0_30], %27 {strides = array<i32>} : memref<8x128xf32, #tpu.memory_space<vmem>>, vector<8x128xf32>,
    return
  }
  func.func @transform_0(%arg0: i32) -> (i32, i32) {
    %c0_i32 = arith.constant 0 : i32
    %c0_i32_0 = arith.constant 0 : i32
    return %arg0, %c0_i32 : i32, i32
  }
  func.func @transform_1(%arg0: i32) -> (i32, i32) {
    %c0_i32 = arith.constant 0 : i32
    %c0_i32_0 = arith.constant 0 : i32
    return %arg0, %c0_i32 : i32, i32
  }
  func.func @transform_2(%arg0: i32) -> (i32, i32) {
    %c0_i32 = arith.constant 0 : i32
    %c0_i32_0 = arith.constant 0 : i32
    %c0_i32_1 = arith.constant 0 : i32
    return %c0_i32, %c0_i32_0 : i32, i32
  }
  func.func @transform_3(%arg0: i32) -> (i32, i32) {
    %c0_i32 = arith.constant 0 : i32
    %c0_i32_0 = arith.constant 0 : i32
    %c0_i32_1 = arith.constant 0 : i32
    return %c0_i32, %c0_i32_0 : i32, i32
  }
  func.func @transform_4(%arg0: i32) -> (i32, i32, i32) {
    %c0_i32 = arith.constant 0 : i32
    %c0_i32_0 = arith.constant 0 : i32
    %c0_i32_1 = arith.constant 0 : i32
    %c0_i32_2 = arith.constant 0 : i32
    return %c0_i32, %c0_i32_0, %c0_i32_1 : i32, i32, i32
  }
  func.func @transform_5(%arg0: i32) -> (i32, i32, i32) {
    %c0_i32 = arith.constant 0 : i32
    %c0_i32_0 = arith.constant 0 : i32
    %c0_i32_1 = arith.constant 0 : i32
    %c0_i32_2 = arith.constant 0 : i32
    return %c0_i32, %c0_i32_0, %c0_i32_1 : i32, i32, i32
  }
  func.func @transform_6(%arg0: i32) -> (i32, i32) {
    %c0_i32 = arith.constant 0 : i32
    %c0_i32_0 = arith.constant 0 : i32
    %c0_i32_1 = arith.constant 0 : i32
    return %c0_i32, %c0_i32_0 : i32, i32
  }
  func.func @transform_7(%arg0: i32) -> (i32, i32) {
    %c0_i32 = arith.constant 0 : i32
    %c0_i32_0 = arith.constant 0 : i32
    %c0_i32_1 = arith.constant 0 : i32
    return %c0_i32, %c0_i32_0 : i32, i32
  }
  func.func @transform_8(%arg0: i32) -> (i32, i32) {
    %c0_i32 = arith.constant 0 : i32
    %c0_i32_0 = arith.constant 0 : i32
    return %arg0, %c0_i32 : i32, i32
  }
}

</mosaic_0001>

<llo_original>
// kernel: tpu_custom_call.1
$region0: #{tpu_custom_call.1}
  #allocation0 [shape = 'u32[]', space=smem, size = 0x4, offset = 0x4, fixed_abs, tag = 'smem constant byte address 0x4 - core index']
  #allocation1 [shape = 'u32[144,128]{1,0:T(1,128)}', space=vmem, size = 0x12000, scoped, tag = 'internal scratch']
  #allocation2 [shape = 'f32[8,128]{1,0:T(8,128)}', space=vmem, size = 0x1000, scoped, tag = 'scratch operand']
  %s0 = inlined_call_operand.vmem [shape: f32[16,16], index: 0, kind: input, shape index: {}]
  %s1 = inlined_call_operand.vmem [shape: f32[16,8], index: 1, kind: input, shape index: {}]
  %s2 = inlined_call_operand.hbm [shape: f32[128,128], index: 2, kind: input, shape index: {}]
  %s3 = inlined_call_operand.vmem [shape: f32[1,128], index: 3, kind: input, shape index: {}]
  %s4 = inlined_call_operand.hbm [shape: f32[1,128,128], index: 4, kind: input, shape index: {}]
  %s5 = inlined_call_operand.vmem [shape: f32[1,1,128], index: 5, kind: input, shape index: {}]
  %s6 = inlined_call_operand.hbm [shape: f32[128,128], index: 6, kind: input, shape index: {}]
  %s7 = inlined_call_operand.vmem [shape: f32[1,128], index: 7, kind: input, shape index: {}]
  %s8 = inlined_call_operand.hbm [shape: f32[16,128], index: 8, kind: output, shape index: {}]
  %s9 = sld [smem:[#allocation0]]
  $region77: #{tpu_custom_call.1} parent=0
    _
  %s11 = ssub.s32 1, %s9
  %s12 = scalar_select 0, %s11, %s9
  $region1: #{tpu_custom_call.1} parent=0
    #allocation3 [shape = 'u8[65536]{0}', space=vmem, size = 0x10000, scoped, tag = 'input window, operand 2, single buffered']
    #allocation4 [shape = 's32[2]{0}', space=sflag, size = 0x8, scoped, tag = 'scoped memory for tpu_custom_call.1']
    #allocation5 [shape = 's32[2]{0}', space=sflag, size = 0x8, scoped, tag = 'scoped memory for tpu_custom_call.1']
    #allocation6 [shape = 'u8[65536]{0}', space=vmem, size = 0x10000, scoped, tag = 'input window, operand 4, single buffered']
    #allocation7 [shape = 's32[1]{0}', space=sflag, size = 0x4, scoped, tag = 'scoped memory for tpu_custom_call.1']
    #allocation8 [shape = 'u8[65536]{0}', space=vmem, size = 0x10000, scoped, tag = 'input window, operand 6, single buffered']
    #allocation9 [shape = 'u8[8192]{0}', space=vmem, size = 0x2000, scoped, tag = 'output window, operand 0']
    %13 = vsyncpa [#allocation4], 0
    %14 = vsyncpa [#allocation7], 0
    %15 = vsyncpa [#allocation5], 0
    %s16 = scalar_lea.sflag [#allocation5], 1
    %17 = vsyncpa %s16, 0
    loop: start=0, step=1, limit=4
    $region2: #{tpu_custom_call.1} parent=1 // loop_pre_header
      _
    $region3: #{tpu_custom_call.1} parent=1 // loop_header
      %s19 = sphi 0, %s23
      %p20 = scmp.ge.s32.totalorder %s19, 4
      %s29 = sphi 0, %s31
      %s32 = sphi 0, %s29
      %s33 = sphi 0, %s32
      %s49 = sphi 0, %s33
      %s55 = sphi 0, %s57
      %s58 = sphi 0, %s55
      %s59 = sphi 0, %s58
      %s75 = sphi 0, %s59
      %s79 = sphi 0, %s79
      %s81 = sphi 0, %s79
      %s82 = sphi 0, %s81
      %s96 = sphi 0, %s82
      %s100 = sphi 0, %s100
      %s102 = sphi 0, %s100
      %s103 = sphi 0, %s102
      %s117 = sphi 0, %s103
      %s121 = sphi 0, %s121
      %s123 = sphi 0, %s121
      %s124 = sphi 0, %s123
      %s138 = sphi 0, %s124
      %s142 = sphi 0, %s142
      %s144 = sphi 0, %s142
      %s145 = sphi 0, %s144
      %s159 = sphi 0, %s145
      %s163 = sphi 0, %s163
      %s165 = sphi 0, %s163
      %s166 = sphi 0, %s165
      %s180 = sphi 0, %s166
      %s184 = sphi 0, %s184
      %s186 = sphi 0, %s184
      %s187 = sphi 0, %s186
      %s201 = sphi 0, %s187
      %s207 = sphi 0, %s209
      %s210 = sphi 0, %s207
      %s211 = sphi 0, %s210
      %s227 = sphi 0, %s211
    $region4: #{tpu_custom_call.1} parent=1 // loop_header_branch
      %22 = sbr.rel (%p20) target = $region8
    $region5: #{tpu_custom_call.1} parent=1 // loop_body
      %s24 = ssub.s32 %s19, 1
      %s25 = ssub.s32 %s19, 2
      %s26 = sadd.s32 %s19, 1
      %s27 = ssub.s32 %s19, %s26
      %p28 = scmp.eq.s32.totalorder %s27, 0
      %s30 = sadd.s32 %s29, 1
      %s31 = scalar_select %p28, %s29, %s30
      %p34 = pneg %p28
      %p35 = scmp.eq.s32.totalorder %s19, 1
      %p36 = por %p34, %p35
      %p37 = scmp.ne.s32.totalorder %s29, %s32
      %p38 = scmp.eq.s32.totalorder %s19, 0
      %p39 = por %p37, %p38
      %p40 = scmp.ne.s32.totalorder %s29, %s32
      %p41 = scmp.eq.s32.totalorder %s24, 1
      %p42 = por %p40, %p41
      %p43 = scmp.ne.s32.totalorder %s32, %s33
      %p44 = scmp.eq.s32.totalorder %s24, 0
      %p45 = por %p43, %p44
      %p46 = scmp.ne.s32.totalorder %s32, %s33
      %p47 = scmp.eq.s32.totalorder %s25, 1
      %p48 = por %p46, %p47
      %p50 = scmp.ne.s32.totalorder %s33, %s49
      %p51 = scmp.eq.s32.totalorder %s25, 0
      %p52 = por %p50, %p51
      %s53 = ssub.s32 %s19, %s26
      %p54 = scmp.eq.s32.totalorder %s53, 0
      %s56 = sadd.s32 %s55, 1
      %s57 = scalar_select %p54, %s55, %s56
      %p60 = pneg %p54
      %p61 = scmp.eq.s32.totalorder %s19, 1
      %p62 = por %p60, %p61
      %p63 = scmp.ne.s32.totalorder %s55, %s58
      %p64 = scmp.eq.s32.totalorder %s19, 0
      %p65 = por %p63, %p64
      %p66 = scmp.ne.s32.totalorder %s55, %s58
      %p67 = scmp.eq.s32.totalorder %s24, 1
      %p68 = por %p66, %p67
      %p69 = scmp.ne.s32.totalorder %s58, %s59
      %p70 = scmp.eq.s32.totalorder %s24, 0
      %p71 = por %p69, %p70
      %p72 = scmp.ne.s32.totalorder %s58, %s59
      %p73 = scmp.eq.s32.totalorder %s25, 1
      %p74 = por %p72, %p73
      %p76 = scmp.ne.s32.totalorder %s59, %s75
      %p77 = scmp.eq.s32.totalorder %s25, 0
      %p78 = por %p76, %p77
      %s80 = sadd.s32 %s79, 1
      %p83 = scmp.eq.s32.totalorder %s19, 1
      %p84 = scmp.ne.s32.totalorder %s79, %s81
      %p85 = scmp.eq.s32.totalorder %s19, 0
      %p86 = por %p84, %p85
      %p87 = scmp.ne.s32.totalorder %s79, %s81
      %p88 = scmp.eq.s32.totalorder %s24, 1
      %p89 = por %p87, %p88
      %p90 = scmp.ne.s32.totalorder %s81, %s82
      %p91 = scmp.eq.s32.totalorder %s24, 0
      %p92 = por %p90, %p91
      %p93 = scmp.ne.s32.totalorder %s81, %s82
      %p94 = scmp.eq.s32.totalorder %s25, 1
      %p95 = por %p93, %p94
      %p97 = scmp.ne.s32.totalorder %s82, %s96
      %p98 = scmp.eq.s32.totalorder %s25, 0
      %p99 = por %p97, %p98
      %s101 = sadd.s32 %s100, 1
      %p104 = scmp.eq.s32.totalorder %s19, 1
      %p105 = scmp.ne.s32.totalorder %s100, %s102
      %p106 = scmp.eq.s32.totalorder %s19, 0
      %p107 = por %p105, %p106
      %p108 = scmp.ne.s32.totalorder %s100, %s102
      %p109 = scmp.eq.s32.totalorder %s24, 1
      %p110 = por %p108, %p109
      %p111 = scmp.ne.s32.totalorder %s102, %s103
      %p112 = scmp.eq.s32.totalorder %s24, 0
      %p113 = por %p111, %p112
      %p114 = scmp.ne.s32.totalorder %s102, %s103
      %p115 = scmp.eq.s32.totalorder %s25, 1
      %p116 = por %p114, %p115
      %p118 = scmp.ne.s32.totalorder %s103, %s117
      %p119 = scmp.eq.s32.totalorder %s25, 0
      %p120 = por %p118, %p119
      %s122 = sadd.s32 %s121, 1
      %p125 = scmp.eq.s32.totalorder %s19, 1
      %p126 = scmp.ne.s32.totalorder %s121, %s123
      %p127 = scmp.eq.s32.totalorder %s19, 0
      %p128 = por %p126, %p127
      %p129 = scmp.ne.s32.totalorder %s121, %s123
      %p130 = scmp.eq.s32.totalorder %s24, 1
      %p131 = por %p129, %p130
      %p132 = scmp.ne.s32.totalorder %s123, %s124
      %p133 = scmp.eq.s32.totalorder %s24, 0
      %p134 = por %p132, %p133
      %p135 = scmp.ne.s32.totalorder %s123, %s124
      %p136 = scmp.eq.s32.totalorder %s25, 1
      %p137 = por %p135, %p136
      %p139 = scmp.ne.s32.totalorder %s124, %s138
      %p140 = scmp.eq.s32.totalorder %s25, 0
      %p141 = por %p139, %p140
      %s143 = sadd.s32 %s142, 1
      %p146 = scmp.eq.s32.totalorder %s19, 1
      %p147 = scmp.ne.s32.totalorder %s142, %s144
      %p148 = scmp.eq.s32.totalorder %s19, 0
      %p149 = por %p147, %p148
      %p150 = scmp.ne.s32.totalorder %s142, %s144
      %p151 = scmp.eq.s32.totalorder %s24, 1
      %p152 = por %p150, %p151
      %p153 = scmp.ne.s32.totalorder %s144, %s145
      %p154 = scmp.eq.s32.totalorder %s24, 0
      %p155 = por %p153, %p154
      %p156 = scmp.ne.s32.totalorder %s144, %s145
      %p157 = scmp.eq.s32.totalorder %s25, 1
      %p158 = por %p156, %p157
      %p160 = scmp.ne.s32.totalorder %s145, %s159
      %p161 = scmp.eq.s32.totalorder %s25, 0
      %p162 = por %p160, %p161
      %s164 = sadd.s32 %s163, 1
      %p167 = scmp.eq.s32.totalorder %s19, 1
      %p168 = scmp.ne.s32.totalorder %s163, %s165
      %p169 = scmp.eq.s32.totalorder %s19, 0
      %p170 = por %p168, %p169
      %p171 = scmp.ne.s32.totalorder %s163, %s165
      %p172 = scmp.eq.s32.totalorder %s24, 1
      %p173 = por %p171, %p172
      %p174 = scmp.ne.s32.totalorder %s165, %s166
      %p175 = scmp.eq.s32.totalorder %s24, 0
      %p176 = por %p174, %p175
      %p177 = scmp.ne.s32.totalorder %s165, %s166
      %p178 = scmp.eq.s32.totalorder %s25, 1
      %p179 = por %p177, %p178
      %p181 = scmp.ne.s32.totalorder %s166, %s180
      %p182 = scmp.eq.s32.totalorder %s25, 0
      %p183 = por %p181, %p182
      %s185 = sadd.s32 %s184, 1
      %p188 = scmp.eq.s32.totalorder %s19, 1
      %p189 = scmp.ne.s32.totalorder %s184, %s186
      %p190 = scmp.eq.s32.totalorder %s19, 0
      %p191 = por %p189, %p190
      %p192 = scmp.ne.s32.totalorder %s184, %s186
      %p193 = scmp.eq.s32.totalorder %s24, 1
      %p194 = por %p192, %p193
      %p195 = scmp.ne.s32.totalorder %s186, %s187
      %p196 = scmp.eq.s32.totalorder %s24, 0
      %p197 = por %p195, %p196
      %p198 = scmp.ne.s32.totalorder %s186, %s187
      %p199 = scmp.eq.s32.totalorder %s25, 1
      %p200 = por %p198, %p199
      %p202 = scmp.ne.s32.totalorder %s187, %s201
      %p203 = scmp.eq.s32.totalorder %s25, 0
      %p204 = por %p202, %p203
      %s205 = ssub.s32 %s19, %s26
      %p206 = scmp.eq.s32.totalorder %s205, 0
      %s208 = sadd.s32 %s207, 1
      %s209 = scalar_select %p206, %s207, %s208
      %p212 = pneg %p206
      %p213 = scmp.eq.s32.totalorder %s19, 1
      %p214 = por %p212, %p213
      %p215 = scmp.ne.s32.totalorder %s207, %s210
      %p216 = scmp.eq.s32.totalorder %s19, 0
      %p217 = por %p215, %p216
      %p218 = scmp.ne.s32.totalorder %s207, %s210
      %p219 = scmp.eq.s32.totalorder %s24, 1
      %p220 = por %p218, %p219
      %p221 = scmp.ne.s32.totalorder %s210, %s211
      %p222 = scmp.eq.s32.totalorder %s24, 0
      %p223 = por %p221, %p222
      %p224 = scmp.ne.s32.totalorder %s210, %s211
      %p225 = scmp.eq.s32.totalorder %s25, 1
      %p226 = por %p224, %p225
      %p228 = scmp.ne.s32.totalorder %s211, %s227
      %p229 = scmp.eq.s32.totalorder %s25, 0
      %p230 = por %p228, %p229
      %p231 = scmp.le.s32.totalorder 1, %s19
      %p232 = scmp.lt.s32.totalorder %s19, 3
      %p233 = pnand %p231, %p232
      %p234 = pneg %p233
      // Predicated region
      $region9: #{tpu_custom_call.1} parent=5 // pred_check
        _
      $region10: #{tpu_custom_call.1} parent=5 // pred_check_branch
        %236 = sbr.rel (%p233) target = $region12
      $region11: #{tpu_custom_call.1} parent=5 // pred_region
        %s237 = ssub.s32 %s19, 1
        // Predicated region
        $region13: #{tpu_custom_call.1} parent=11 // pred_check
          %p238 = pneg %p92
        $region14: #{tpu_custom_call.1} parent=11 // pred_check_branch
          %240 = sbr.rel (%p238) target = $region16
        $region15: #{tpu_custom_call.1} parent=11 // pred_region
          %s242 = ssub.s32 2048, 2048
          %243 = vsyncadd [#allocation4], %s242
          %s244 = sshll.u32 [#allocation3], 4
          %s245 = int_to_ptr.vmem [resolvable:$true] %s244
          %250 = dma.hbm_to_vmem [thread:$0]  %s2, 2048, %s245, [#allocation4], 128, 128, 8
        $region16: #{tpu_custom_call.1} parent=11 // pred_fallthru
          _
        // Predicated region
        $region17: #{tpu_custom_call.1} parent=11 // pred_check
          %p251 = pneg %p113
        $region18: #{tpu_custom_call.1} parent=11 // pred_check_branch
          %253 = sbr.rel (%p251) target = $region20
        $region19: #{tpu_custom_call.1} parent=11 // pred_region
          _
        $region20: #{tpu_custom_call.1} parent=11 // pred_fallthru
          _
        // Predicated region
        $region21: #{tpu_custom_call.1} parent=11 // pred_check
          %p254 = pneg %p134
        $region22: #{tpu_custom_call.1} parent=11 // pred_check_branch
          %256 = sbr.rel (%p254) target = $region24
        $region23: #{tpu_custom_call.1} parent=11 // pred_region
          %s258 = ssub.s32 2048, 2048
          %259 = vsyncadd [#allocation7], %s258
          %s260 = sshll.u32 [#allocation6], 4
          %s261 = int_to_ptr.vmem [resolvable:$true] %s260
          %266 = dma.hbm_to_vmem [thread:$0]  %s4, 2048, %s261, [#allocation7], 128, 128, 8
        $region24: #{tpu_custom_call.1} parent=11 // pred_fallthru
          _
        // Predicated region
        $region25: #{tpu_custom_call.1} parent=11 // pred_check
          %p267 = pneg %p155
        $region26: #{tpu_custom_call.1} parent=11 // pred_check_branch
          %269 = sbr.rel (%p267) target = $region28
        $region27: #{tpu_custom_call.1} parent=11 // pred_region
          _
        $region28: #{tpu_custom_call.1} parent=11 // pred_fallthru
          _
        // Predicated region
        $region29: #{tpu_custom_call.1} parent=11 // pred_check
          %p270 = pneg %p176
        $region30: #{tpu_custom_call.1} parent=11 // pred_check_branch
          %272 = sbr.rel (%p270) target = $region32
        $region31: #{tpu_custom_call.1} parent=11 // pred_region
          %s274 = ssub.s32 2048, 2048
          %275 = vsyncadd [#allocation7], %s274
          %s276 = sshll.u32 [#allocation8], 4
          %s277 = int_to_ptr.vmem [resolvable:$true] %s276
          %282 = dma.hbm_to_vmem [thread:$0]  %s6, 2048, %s277, [#allocation7], 128, 128, 8
        $region32: #{tpu_custom_call.1} parent=11 // pred_fallthru
          _
        // Predicated region
        $region33: #{tpu_custom_call.1} parent=11 // pred_check
          %p283 = pneg %p197
        $region34: #{tpu_custom_call.1} parent=11 // pred_check_branch
          %285 = sbr.rel (%p283) target = $region36
        $region35: #{tpu_custom_call.1} parent=11 // pred_region
          _
        $region36: #{tpu_custom_call.1} parent=11 // pred_fallthru
          _
      $region12: #{tpu_custom_call.1} parent=5 // pred_fallthru
        _
      %p286 = scmp.lt.s32.totalorder %s19, 2
      // Predicated region
      $region37: #{tpu_custom_call.1} parent=5 // pred_check
        %p287 = pneg %p286
      $region38: #{tpu_custom_call.1} parent=5 // pred_check_branch
        %289 = sbr.rel (%p287) target = $region40
      $region39: #{tpu_custom_call.1} parent=5 // pred_region
        // Predicated region
        $region41: #{tpu_custom_call.1} parent=39 // pred_check
          %p290 = pneg %p39
        $region42: #{tpu_custom_call.1} parent=39 // pred_check_branch
          %292 = sbr.rel (%p290) target = $region44
        $region43: #{tpu_custom_call.1} parent=39 // pred_region
          %p293 = scmp.lt.s32.totalorder %s19, 1
          %s294 = scalar_select %p293, %s19, 1
          %s295 = smul.addr %s294, 8
          %s296 = scalar_lea.vmem %s0, %s295
        $region44: #{tpu_custom_call.1} parent=39 // pred_fallthru
          _
        // Predicated region
        $region45: #{tpu_custom_call.1} parent=39 // pred_check
          %p297 = pneg %p65
        $region46: #{tpu_custom_call.1} parent=39 // pred_check_branch
          %299 = sbr.rel (%p297) target = $region48
        $region47: #{tpu_custom_call.1} parent=39 // pred_region
          %p300 = scmp.lt.s32.totalorder %s19, 1
          %s301 = scalar_select %p300, %s19, 1
          %s302 = smul.addr %s301, 8
          %s303 = scalar_lea.vmem %s1, %s302
        $region48: #{tpu_custom_call.1} parent=39 // pred_fallthru
          _
      $region40: #{tpu_custom_call.1} parent=5 // pred_fallthru
        _
      %p304 = scmp.le.s32.totalorder 1, %s19
      %p305 = scmp.lt.s32.totalorder %s19, 3
      %p306 = pnand %p304, %p305
      %p307 = pneg %p306
      // Predicated region
      $region49: #{tpu_custom_call.1} parent=5 // pred_check
        _
      $region50: #{tpu_custom_call.1} parent=5 // pred_check_branch
        %309 = sbr.rel (%p306) target = $region52
      $region51: #{tpu_custom_call.1} parent=5 // pred_region
        %s310 = ssub.s32 %s19, 1
        // Predicated region
        $region53: #{tpu_custom_call.1} parent=51 // pred_check
          %p311 = pneg %p92
        $region54: #{tpu_custom_call.1} parent=51 // pred_check_branch
          %313 = sbr.rel (%p311) target = $region56
        $region55: #{tpu_custom_call.1} parent=51 // pred_region
          %314 = dma.done [#allocation4], 2048
        $region56: #{tpu_custom_call.1} parent=51 // pred_fallthru
          _
        // Predicated region
        $region57: #{tpu_custom_call.1} parent=51 // pred_check
          %p315 = pneg %p134
        $region58: #{tpu_custom_call.1} parent=51 // pred_check_branch
          %317 = sbr.rel (%p315) target = $region60
        $region59: #{tpu_custom_call.1} parent=51 // pred_region
          %318 = dma.done [#allocation7], 2048
        $region60: #{tpu_custom_call.1} parent=51 // pred_fallthru
          _
        // Predicated region
        $region61: #{tpu_custom_call.1} parent=51 // pred_check
          %p319 = pneg %p176
        $region62: #{tpu_custom_call.1} parent=51 // pred_check_branch
          %321 = sbr.rel (%p319) target = $region64
        $region63: #{tpu_custom_call.1} parent=51 // pred_region
          %322 = dma.done [#allocation7], 2048
        $region64: #{tpu_custom_call.1} parent=51 // pred_fallthru
          _
        %p323 = scmp.lt.s32.totalorder %s24, 1
        %s324 = scalar_select %p323, %s24, 1
        %s325 = smul.addr %s324, 8
        %s326 = scalar_lea.vmem %s0, %s325
        %p327 = pneg %p45
        %p328 = pneg %p42
        %p329 = scmp.lt.s32.totalorder %s24, 1
        %s330 = scalar_select %p329, %s24, 1
        %s331 = smul.addr %s330, 8
        %s332 = scalar_lea.vmem %s1, %s331
        %p333 = pneg %p71
        %p334 = pneg %p68
        %p335 = pneg %p92
        %p336 = pneg %p89
        %p337 = pneg %p113
        %p338 = pneg %p110
        %p339 = pneg %p134
        %p340 = pneg %p131
        %p341 = pneg %p155
        %p342 = pneg %p152
        %p343 = pneg %p176
        %p344 = pneg %p173
        %p345 = pneg %p197
        %p346 = pneg %p194
        %p347 = pneg %p223
        %p348 = pneg %p220
        %s349 = sand.u32 %s210, 1
        %s350 = scalar_lea.sflag [#allocation5], %s349
        %s351 = sand.u32 %s210, 1
        %s352 = smul.addr %s351, 8
        %s353 = scalar_lea.vmem [#allocation9], %s352
        %p354 = scmp.lt.s32.totalorder %s24, 1
        %s355 = scalar_select %p354, %s24, 1
        %s356 = smul.addr %s355, 8
        %s357 = scalar_lea.vmem %s0, %s356
        %p358 = scmp.lt.s32.totalorder %s24, 1
        %s359 = scalar_select %p358, %s24, 1
        %s360 = smul.addr %s359, 8
        %s361 = scalar_lea.vmem %s1, %s360
        %362 = vst [vmem:[#allocation2] sm:$0xff] 0.0
        %v363 = vld [vmem:[%s357] sm:$0xff]
        %vm364 = vcmask 130048
        %365 = vst.msk [vmem:[#allocation2] sm:$0xff] %vm364, %v363
        %v366 = vld [vmem:[%s361] sm:$0xff]
        %368 = vrot.lane.b32.xlu0 %v366, 16
        %v369 = vpop.permute.xlu0 %368
        %vm371 = vcmask 195712
        %372 = vst.msk [vmem:[#allocation2] sm:$0xff] %vm371, %v369
        %v373 = vld [vmem:[#allocation2] sm:$0xff]
        %v374 = vld [vmem:[#allocation3] sm:$0xff]
        %v375 = vld [vmem:[#allocation3 + $0x8] sm:$0xff]
        %v376 = vld [vmem:[#allocation3 + $0x10] sm:$0xff]
        %v377 = vld [vmem:[#allocation3 + $0x18] sm:$0xff]
        %v378 = vld [vmem:[#allocation3 + $0x20] sm:$0xff]
        %v379 = vld [vmem:[#allocation3 + $0x28] sm:$0xff]
        %v380 = vld [vmem:[#allocation3 + $0x30] sm:$0xff]
        %v381 = vld [vmem:[#allocation3 + $0x38] sm:$0xff]
        %v382 = vld [vmem:[#allocation3 + $0x40] sm:$0xff]
        %v383 = vld [vmem:[#allocation3 + $0x48] sm:$0xff]
        %v384 = vld [vmem:[#allocation3 + $0x50] sm:$0xff]
        %v385 = vld [vmem:[#allocation3 + $0x58] sm:$0xff]
        %v386 = vld [vmem:[#allocation3 + $0x60] sm:$0xff]
        %v387 = vld [vmem:[#allocation3 + $0x68] sm:$0xff]
        %v388 = vld [vmem:[#allocation3 + $0x70] sm:$0xff]
        %v389 = vld [vmem:[#allocation3 + $0x78] sm:$0xff]
        %v390 = vld [vmem:[%s3] sm:$0x1]
        %v392 = vlaneseq
        %v393 = vshrl.u32 %v392, 7
        %v394 = vsub.s32 0, %v393
        %v395 = vrot.slane %v390, %v394
        %397 = vmatprep.subr.mxu0 0.0
        %398 = vmatpush1.msra.mxu0 %v374
        %399 = vmatprep.subr.mxu0 0.0
        %400 = vmatpush1.msra.mxu0 %v375
        %401 = vmatprep.subr.mxu0 0.0
        %402 = vmatpush1.msra.mxu0 %v376
        %403 = vmatprep.subr.mxu0 0.0
        %404 = vmatpush1.msra.mxu0 %v377
        %405 = vmatprep.subr.mxu0 0.0
        %406 = vmatpush1.msra.mxu0 %v378
        %407 = vmatprep.subr.mxu0 0.0
        %408 = vmatpush1.msra.mxu0 %v379
        %409 = vmatprep.subr.mxu0 0.0
        %410 = vmatpush1.msra.mxu0 %v380
        %411 = vmatprep.subr.mxu0 0.0
        %412 = vmatpush1.msra.mxu0 %v381
        %413 = vmatprep.subr.mxu0 0.0
        %414 = vmatpush1.msra.mxu0 %v382
        %415 = vmatprep.subr.mxu0 0.0
        %416 = vmatpush1.msra.mxu0 %v383
        %417 = vmatprep.subr.mxu0 0.0
        %418 = vmatpush1.msra.mxu0 %v384
        %419 = vmatprep.subr.mxu0 0.0
        %420 = vmatpush1.msra.mxu0 %v385
        %421 = vmatprep.subr.mxu0 0.0
        %422 = vmatpush1.msra.mxu0 %v386
        %423 = vmatprep.subr.mxu0 0.0
        %424 = vmatpush1.msra.mxu0 %v387
        %425 = vmatprep.subr.mxu0 0.0
        %426 = vmatpush1.msra.mxu0 %v388
        %427 = vmatprep.subr.mxu0 0.0
        %428 = vmatpush1.msra.mxu0 %v389
        %429 = vmatprep.subr.mxu0 0.0
        %430 = vmatpush1.msra.mxu0 0.0
        %431 = vmatprep.subr.mxu0 0.0
        %432 = vmatpush1.msra.mxu0 0.0
        %433 = vmatprep.subr.mxu0 0.0
        %434 = vmatpush1.msra.mxu0 0.0
        %435 = vmatprep.subr.mxu0 0.0
        %436 = vmatpush1.msra.mxu0 0.0
        %437 = vmatprep.subr.mxu0 0.0
        %438 = vmatpush1.msra.mxu0 0.0
        %439 = vmatprep.subr.mxu0 0.0
        %440 = vmatpush1.msra.mxu0 0.0
        %441 = vmatprep.subr.mxu0 0.0
        %442 = vmatpush1.msra.mxu0 0.0
        %443 = vmatprep.subr.mxu0 0.0
        %444 = vmatpush1.msra.mxu0 0.0
        %445 = vmatprep.subr.mxu0 0.0
        %446 = vmatpush1.msra.mxu0 0.0
        %447 = vmatprep.subr.mxu0 0.0
        %448 = vmatpush1.msra.mxu0 0.0
        %449 = vmatprep.subr.mxu0 0.0
        %450 = vmatpush1.msra.mxu0 0.0
        %451 = vmatprep.subr.mxu0 0.0
        %452 = vmatpush1.msra.mxu0 0.0
        %453 = vmatprep.subr.mxu0 0.0
        %454 = vmatpush1.msra.mxu0 0.0
        %455 = vmatprep.subr.mxu0 0.0
        %456 = vmatpush1.msra.mxu0 0.0
        %457 = vmatprep.subr.mxu0 0.0
        %458 = vmatpush1.msra.mxu0 0.0
        %459 = vmatprep.subr.mxu0 0.0
        %460 = vmatpush1.msra.mxu0 0.0
        %461 = vmatprep.mubr.f32.mxu0 0.0
        %462 = vmatmul.mubr.f32.gmra.mrb[0].mxu0 %v373
        %v463 = vpop.f32.mrb[0].mxu0
        %v464 = vadd.f32 %v395, %v463
        %v465 = vpop.f32.mrb[0].mxu0
        %466 = vdwg.mxu0
        %v467 = vmax.f32 %v464, 0.0
        %v468 = vld [vmem:[#allocation6] sm:$0xff]
        %v469 = vld [vmem:[#allocation6 + $0x8] sm:$0xff]
        %v470 = vld [vmem:[#allocation6 + $0x10] sm:$0xff]
        %v471 = vld [vmem:[#allocation6 + $0x18] sm:$0xff]
        %v472 = vld [vmem:[#allocation6 + $0x20] sm:$0xff]
        %v473 = vld [vmem:[#allocation6 + $0x28] sm:$0xff]
        %v474 = vld [vmem:[#allocation6 + $0x30] sm:$0xff]
        %v475 = vld [vmem:[#allocation6 + $0x38] sm:$0xff]
        %v476 = vld [vmem:[#allocation6 + $0x40] sm:$0xff]
        %v477 = vld [vmem:[#allocation6 + $0x48] sm:$0xff]
        %v478 = vld [vmem:[#allocation6 + $0x50] sm:$0xff]
        %v479 = vld [vmem:[#allocation6 + $0x58] sm:$0xff]
        %v480 = vld [vmem:[#allocation6 + $0x60] sm:$0xff]
        %v481 = vld [vmem:[#allocation6 + $0x68] sm:$0xff]
        %v482 = vld [vmem:[#allocation6 + $0x70] sm:$0xff]
        %v483 = vld [vmem:[#allocation6 + $0x78] sm:$0xff]
        %v484 = vld [vmem:[%s5] sm:$0x1]
        %v486 = vlaneseq
        %v487 = vshrl.u32 %v486, 7
        %v488 = vsub.s32 0, %v487
        %v489 = vrot.slane %v484, %v488
        %491 = vmatprep.subr.mxu0 0.0
        %492 = vmatpush1.msra.mxu0 %v468
        %493 = vmatprep.subr.mxu0 0.0
        %494 = vmatpush1.msra.mxu0 %v469
        %495 = vmatprep.subr.mxu0 0.0
        %496 = vmatpush1.msra.mxu0 %v470
        %497 = vmatprep.subr.mxu0 0.0
        %498 = vmatpush1.msra.mxu0 %v471
        %499 = vmatprep.subr.mxu0 0.0
        %500 = vmatpush1.msra.mxu0 %v472
        %501 = vmatprep.subr.mxu0 0.0
        %502 = vmatpush1.msra.mxu0 %v473
        %503 = vmatprep.subr.mxu0 0.0
        %504 = vmatpush1.msra.mxu0 %v474
        %505 = vmatprep.subr.mxu0 0.0
        %506 = vmatpush1.msra.mxu0 %v475
        %507 = vmatprep.subr.mxu0 0.0
        %508 = vmatpush1.msra.mxu0 %v476
        %509 = vmatprep.subr.mxu0 0.0
        %510 = vmatpush1.msra.mxu0 %v477
        %511 = vmatprep.subr.mxu0 0.0
        %512 = vmatpush1.msra.mxu0 %v478
        %513 = vmatprep.subr.mxu0 0.0
        %514 = vmatpush1.msra.mxu0 %v479
        %515 = vmatprep.subr.mxu0 0.0
        %516 = vmatpush1.msra.mxu0 %v480
        %517 = vmatprep.subr.mxu0 0.0
        %518 = vmatpush1.msra.mxu0 %v481
        %519 = vmatprep.subr.mxu0 0.0
        %520 = vmatpush1.msra.mxu0 %v482
        %521 = vmatprep.subr.mxu0 0.0
        %522 = vmatpush1.msra.mxu0 %v483
        %523 = vmatprep.subr.mxu0 0.0
        %524 = vmatpush1.msra.mxu0 0.0
        %525 = vmatprep.subr.mxu0 0.0
        %526 = vmatpush1.msra.mxu0 0.0
        %527 = vmatprep.subr.mxu0 0.0
        %528 = vmatpush1.msra.mxu0 0.0
        %529 = vmatprep.subr.mxu0 0.0
        %530 = vmatpush1.msra.mxu0 0.0
        %531 = vmatprep.subr.mxu0 0.0
        %532 = vmatpush1.msra.mxu0 0.0
        %533 = vmatprep.subr.mxu0 0.0
        %534 = vmatpush1.msra.mxu0 0.0
        %535 = vmatprep.subr.mxu0 0.0
        %536 = vmatpush1.msra.mxu0 0.0
        %537 = vmatprep.subr.mxu0 0.0
        %538 = vmatpush1.msra.mxu0 0.0
        %539 = vmatprep.subr.mxu0 0.0
        %540 = vmatpush1.msra.mxu0 0.0
        %541 = vmatprep.subr.mxu0 0.0
        %542 = vmatpush1.msra.mxu0 0.0
        %543 = vmatprep.subr.mxu0 0.0
        %544 = vmatpush1.msra.mxu0 0.0
        %545 = vmatprep.subr.mxu0 0.0
        %546 = vmatpush1.msra.mxu0 0.0
        %547 = vmatprep.subr.mxu0 0.0
        %548 = vmatpush1.msra.mxu0 0.0
        %549 = vmatprep.subr.mxu0 0.0
        %550 = vmatpush1.msra.mxu0 0.0
        %551 = vmatprep.subr.mxu0 0.0
        %552 = vmatpush1.msra.mxu0 0.0
        %553 = vmatprep.subr.mxu0 0.0
        %554 = vmatpush1.msra.mxu0 0.0
        %555 = vmatprep.mubr.f32.mxu0 0.0
        %556 = vmatmul.mubr.f32.gmra.mrb[0].mxu0 %v467
        %v557 = vpop.f32.mrb[0].mxu0
        %v558 = vadd.f32 %v489, %v557
        %v559 = vpop.f32.mrb[0].mxu0
        %560 = vdwg.mxu0
        %v561 = vmax.f32 %v558, 0.0
        %v562 = vld [vmem:[#allocation8] sm:$0xff]
        %v563 = vld [vmem:[#allocation8 + $0x8] sm:$0xff]
        %v564 = vld [vmem:[#allocation8 + $0x10] sm:$0xff]
        %v565 = vld [vmem:[#allocation8 + $0x18] sm:$0xff]
        %v566 = vld [vmem:[#allocation8 + $0x20] sm:$0xff]
        %v567 = vld [vmem:[#allocation8 + $0x28] sm:$0xff]
        %v568 = vld [vmem:[#allocation8 + $0x30] sm:$0xff]
        %v569 = vld [vmem:[#allocation8 + $0x38] sm:$0xff]
        %v570 = vld [vmem:[#allocation8 + $0x40] sm:$0xff]
        %v571 = vld [vmem:[#allocation8 + $0x48] sm:$0xff]
        %v572 = vld [vmem:[#allocation8 + $0x50] sm:$0xff]
        %v573 = vld [vmem:[#allocation8 + $0x58] sm:$0xff]
        %v574 = vld [vmem:[#allocation8 + $0x60] sm:$0xff]
        %v575 = vld [vmem:[#allocation8 + $0x68] sm:$0xff]
        %v576 = vld [vmem:[#allocation8 + $0x70] sm:$0xff]
        %v577 = vld [vmem:[#allocation8 + $0x78] sm:$0xff]
        %v578 = vld [vmem:[%s7] sm:$0x1]
        %v580 = vlaneseq
        %v581 = vshrl.u32 %v580, 7
        %v582 = vsub.s32 0, %v581
        %v583 = vrot.slane %v578, %v582
        %585 = vmatprep.subr.mxu0 0.0
        %586 = vmatpush1.msra.mxu0 %v562
        %587 = vmatprep.subr.mxu0 0.0
        %588 = vmatpush1.msra.mxu0 %v563
        %589 = vmatprep.subr.mxu0 0.0
        %590 = vmatpush1.msra.mxu0 %v564
        %591 = vmatprep.subr.mxu0 0.0
        %592 = vmatpush1.msra.mxu0 %v565
        %593 = vmatprep.subr.mxu0 0.0
        %594 = vmatpush1.msra.mxu0 %v566
        %595 = vmatprep.subr.mxu0 0.0
        %596 = vmatpush1.msra.mxu0 %v567
        %597 = vmatprep.subr.mxu0 0.0
        %598 = vmatpush1.msra.mxu0 %v568
        %599 = vmatprep.subr.mxu0 0.0
        %600 = vmatpush1.msra.mxu0 %v569
        %601 = vmatprep.subr.mxu0 0.0
        %602 = vmatpush1.msra.mxu0 %v570
        %603 = vmatprep.subr.mxu0 0.0
        %604 = vmatpush1.msra.mxu0 %v571
        %605 = vmatprep.subr.mxu0 0.0
        %606 = vmatpush1.msra.mxu0 %v572
        %607 = vmatprep.subr.mxu0 0.0
        %608 = vmatpush1.msra.mxu0 %v573
        %609 = vmatprep.subr.mxu0 0.0
        %610 = vmatpush1.msra.mxu0 %v574
        %611 = vmatprep.subr.mxu0 0.0
        %612 = vmatpush1.msra.mxu0 %v575
        %613 = vmatprep.subr.mxu0 0.0
        %614 = vmatpush1.msra.mxu0 %v576
        %615 = vmatprep.subr.mxu0 0.0
        %616 = vmatpush1.msra.mxu0 %v577
        %617 = vmatprep.subr.mxu0 0.0
        %618 = vmatpush1.msra.mxu0 0.0
        %619 = vmatprep.subr.mxu0 0.0
        %620 = vmatpush1.msra.mxu0 0.0
        %621 = vmatprep.subr.mxu0 0.0
        %622 = vmatpush1.msra.mxu0 0.0
        %623 = vmatprep.subr.mxu0 0.0
        %624 = vmatpush1.msra.mxu0 0.0
        %625 = vmatprep.subr.mxu0 0.0
        %626 = vmatpush1.msra.mxu0 0.0
        %627 = vmatprep.subr.mxu0 0.0
        %628 = vmatpush1.msra.mxu0 0.0
        %629 = vmatprep.subr.mxu0 0.0
        %630 = vmatpush1.msra.mxu0 0.0
        %631 = vmatprep.subr.mxu0 0.0
        %632 = vmatpush1.msra.mxu0 0.0
        %633 = vmatprep.subr.mxu0 0.0
        %634 = vmatpush1.msra.mxu0 0.0
        %635 = vmatprep.subr.mxu0 0.0
        %636 = vmatpush1.msra.mxu0 0.0
        %637 = vmatprep.subr.mxu0 0.0
        %638 = vmatpush1.msra.mxu0 0.0
        %639 = vmatprep.subr.mxu0 0.0
        %640 = vmatpush1.msra.mxu0 0.0
        %641 = vmatprep.subr.mxu0 0.0
        %642 = vmatpush1.msra.mxu0 0.0
        %643 = vmatprep.subr.mxu0 0.0
        %644 = vmatpush1.msra.mxu0 0.0
        %645 = vmatprep.subr.mxu0 0.0
        %646 = vmatpush1.msra.mxu0 0.0
        %647 = vmatprep.subr.mxu0 0.0
        %648 = vmatpush1.msra.mxu0 0.0
        %649 = vmatprep.mubr.f32.mxu0 0.0
        %650 = vmatmul.mubr.f32.gmra.mrb[0].mxu0 %v561
        %v651 = vpop.f32.mrb[0].mxu0
        %v652 = vadd.f32 %v583, %v651
        %v653 = vpop.f32.mrb[0].mxu0
        %654 = vdwg.mxu0
        %655 = vst [vmem:[%s353] sm:$0xff] %v652
        %s656 = sand.u32 %s210, 1
        %s657 = scalar_lea.sflag [#allocation5], %s656
        %s658 = sand.u32 %s210, 1
        %s659 = smul.addr %s658, 8
        %s660 = scalar_lea.vmem [#allocation9], %s659
        // Predicated region
        $region65: #{tpu_custom_call.1} parent=51 // pred_check
          %p661 = pneg %p220
        $region66: #{tpu_custom_call.1} parent=51 // pred_check_branch
          %663 = sbr.rel (%p661) target = $region68
        $region67: #{tpu_custom_call.1} parent=51 // pred_region
          %s665 = ssub.s32 128, 128
          %666 = vsyncadd %s657, %s665
          %s667 = smul.addr %s24, 128
          %s668 = scalar_lea.hbm %s8, %s667
          %s670 = sshll.u32 %s660, 4
          %s671 = int_to_ptr.vmem [resolvable:$true] %s670
          %673 = dma.vmem_to_hbm [thread:$0]  %s671, 128, %s668, %s657
        $region68: #{tpu_custom_call.1} parent=51 // pred_fallthru
          _
      $region52: #{tpu_custom_call.1} parent=5 // pred_fallthru
        _
      %p674 = scmp.le.s32.totalorder 2, %s19
      // Predicated region
      $region69: #{tpu_custom_call.1} parent=5 // pred_check
        %p675 = pneg %p674
      $region70: #{tpu_custom_call.1} parent=5 // pred_check_branch
        %677 = sbr.rel (%p675) target = $region72
      $region71: #{tpu_custom_call.1} parent=5 // pred_region
        %s678 = ssub.s32 %s19, 2
        // Predicated region
        $region73: #{tpu_custom_call.1} parent=71 // pred_check
          %p679 = pneg %p226
        $region74: #{tpu_custom_call.1} parent=71 // pred_check_branch
          %681 = sbr.rel (%p679) target = $region76
        $region75: #{tpu_custom_call.1} parent=71 // pred_region
          %s682 = sand.u32 %s211, 1
          %s683 = scalar_lea.sflag [#allocation5], %s682
          %s684 = sand.u32 %s211, 1
          %s685 = smul.addr %s684, 8
          %s686 = scalar_lea.vmem [#allocation9], %s685
          %687 = dma.done %s683, 128
        $region76: #{tpu_custom_call.1} parent=71 // pred_fallthru
          _
      $region72: #{tpu_custom_call.1} parent=5 // pred_fallthru
        _
    $region6: #{tpu_custom_call.1} parent=1 // loop_footer
      %s23 = sadd.s32 1, %s19
    $region7: #{tpu_custom_call.1} parent=1 // loop_footer_branch
      %18 = sbr.rel target = $region3
    $region8: #{tpu_custom_call.1} parent=1 // loop_exit
      _
    %688 = vsyncpa [#allocation4], 1
    %s689 = scalar_lea.sflag [#allocation4], 1
    %690 = vsyncpa %s689, 1
    %691 = vsyncpa [#allocation7], 1
    %692 = vsyncpa [#allocation5], 1
    %s693 = scalar_lea.sflag [#allocation5], 1
    %694 = vsyncpa %s693, 1

</llo_original>
